<compile_context>
chip_gen: v6e
topology: v6e:2x2x1
jax: 0.10.0
libtpu: 0.0.40
codegen_flags: <defaults>
</compile_context>

<pallas_src>
import functools

import jax
import jax.numpy as jnp
from jax.experimental import pallas as pl
from jax.experimental.pallas import tpu as pltpu


def _round_up(n, m):
    return ((n + m - 1) // m) * m


def _dqn_kernel(*refs, num_layers, state_dim, pad_input):
    """refs = (x, w1, b1, ..., wL, bL, out[, xpad_scratch]).

    x:     (TB, S)       input batch tile, natural (unpadded) feature width, any float dtype
    w_i:   (inp, outp)   bf16, zero-padded to 128-multiples, VMEM-resident across grid steps
    b_i:   (1, outp)     f32
    out:   (TB, A)       f32, natural (unpadded) action width
    xpad:  (TB, S_pad)   bf16 scratch, only present when S needs lane padding
    """
    x_ref = refs[0]
    if pad_input:
        out_ref = refs[-2]
        xpad_ref = refs[-1]
        param_refs = refs[1:-2]
        # Zero-pad the input tile to the MXU-friendly width inside VMEM (cheap; avoids an
        # HBM round trip of a padded input array and the 8-16x input read amplification).
        xpad_ref[...] = jnp.zeros_like(xpad_ref)
        xpad_ref[:, :state_dim] = x_ref[...].astype(xpad_ref.dtype)
        h = xpad_ref[...]
    else:
        out_ref = refs[-1]
        param_refs = refs[1:-1]
        h = x_ref[...].astype(jnp.bfloat16)

    acc = None
    for layer in range(num_layers):
        w = param_refs[2 * layer][...]       # bf16
        b = param_refs[2 * layer + 1][...]   # f32 (1, out) broadcast
        # bf16 x bf16 -> f32 MXU accumulate; bias add + ReLU kept in f32.
        acc = jnp.dot(h, w, preferred_element_type=jnp.float32) + b
        if layer < num_layers - 1:
            # Carry the activation in bf16 between layers: one cast per layer, halves the
            # live intermediate footprint / vreg pressure.
            h = jnp.maximum(acc, 0.0).astype(jnp.bfloat16)

    # Write only the real action columns: minimal HBM write bytes, no wrapper slice-copy.
    out_ref[...] = acc[:, : out_ref.shape[-1]].astype(out_ref.dtype)


def prepare_dqn_params(params):
    """One-time parameter prep (hoisted out of the per-forward hot path).

    Zero-pads every feature dim to a multiple of 128 and casts weights to bf16 (MXU-native
    rate, half the resident VMEM / HBM traffic); biases stay f32.  Returns (weights, biases)
    tuples of padded arrays to be passed to dqn_forward.
    """
    dims = [params[0][0].shape[0]] + [w.shape[1] for w, _ in params]
    dims_p = [_round_up(d, 128) for d in dims]
    weights, biases = [], []
    for i, (w, b) in enumerate(params):
        w_p = (jnp.zeros((dims_p[i], dims_p[i + 1]), jnp.bfloat16)
               .at[: w.shape[0], : w.shape[1]].set(w.astype(jnp.bfloat16)))
        b2 = jnp.asarray(b, jnp.float32).reshape(1, -1)
        b_p = (jnp.zeros((1, dims_p[i + 1]), jnp.float32)
               .at[:, : b2.shape[1]].set(b2))
        weights.append(w_p)
        biases.append(b_p)
    return tuple(weights), tuple(biases)


@functools.partial(jax.jit, static_argnames=("action_dim", "block_b"))
def dqn_forward(states, weights, biases, *, action_dim, block_b=1024):
    """states: (*, S) float array (f32 or bf16, consumed as-is); weights/biases from
    prepare_dqn_params.  Returns (*, A) f32 Q-values."""
    num_layers = len(weights)
    lead = states.shape[:-1]
    state_dim = states.shape[-1]

    dims_p = [weights[0].shape[0]] + [w.shape[1] for w in weights]
    assert state_dim <= dims_p[0], "states feature dim does not match prepared params"
    assert action_dim <= dims_p[-1], "action_dim does not match prepared params"

    x = states.reshape(-1, state_dim)
    batch = x.shape[0]

    # Batch tile: big enough to amortize per-step overhead / feed the MXU, small enough to
    # leave >= 2 grid steps when the batch allows it (so "parallel" shards across both
    # TensorCores on v7x).
    batch8 = _round_up(max(batch, 1), 8)
    if 16 <= batch8 <= block_b:
        tb = _round_up((batch8 + 1) // 2, 8)
    else:
        tb = min(block_b, batch8)
    batch_p = _round_up(batch8, tb)
    grid = (batch_p // tb,)

    if batch_p != batch:
        x = jnp.concatenate(
            [x, jnp.zeros((batch_p - batch, state_dim), x.dtype)], axis=0)

    pad_input = dims_p[0] != state_dim

    in_specs = [pl.BlockSpec((tb, state_dim), lambda i: (i, 0))]
    flat_params = []
    for layer in range(num_layers):
        in_specs.append(pl.BlockSpec(weights[layer].shape, lambda i: (0, 0)))
        in_specs.append(pl.BlockSpec(biases[layer].shape, lambda i: (0, 0)))
        flat_params.extend([weights[layer], biases[layer]])

    scratch_shapes = []
    if pad_input:
        scratch_shapes.append(pltpu.VMEM((tb, dims_p[0]), jnp.bfloat16))

    # Real VMEM footprint (x2 headroom), capped well below v7x's 64 MiB physical VMEM.
    param_bytes = sum(int(p.size) * p.dtype.itemsize for p in flat_params)
    vmem_est = (
        2 * tb * state_dim * x.dtype.itemsize        # double-buffered input blocks
        + 2 * tb * action_dim * 4                    # double-buffered output blocks
        + 2 * param_bytes                            # resident (double-buffered) params
        + (tb * dims_p[0] * 2 if pad_input else 0)   # input-pad scratch
        + 3 * tb * max(dims_p) * 4                   # live f32/bf16 activations (rough)
    )
    vmem_limit = int(min(48 * 2**20, max(16 * 2**20, 2 * vmem_est)))

    flops = 2 * batch_p * sum(dims_p[i] * dims_p[i + 1] for i in range(num_layers))
    bytes_accessed = (int(x.size) * x.dtype.itemsize
                      + param_bytes
                      + batch_p * action_dim * 4)
    cost = pl.CostEstimate(flops=int(flops), transcendentals=0,
                           bytes_accessed=int(bytes_accessed))

    kernel = functools.partial(_dqn_kernel, num_layers=num_layers,
                               state_dim=state_dim, pad_input=pad_input)

    out = pl.pallas_call(
        kernel,
        out_shape=jax.ShapeDtypeStruct((batch_p, action_dim), jnp.float32),
        grid=grid,
        in_specs=in_specs,
        out_specs=pl.BlockSpec((tb, action_dim), lambda i: (i, 0)),
        scratch_shapes=scratch_shapes,
        compiler_params=pltpu.CompilerParams(
            dimension_semantics=("parallel",),
            vmem_limit_bytes=vmem_limit,
        ),
        cost_estimate=cost,
    )(x, *flat_params)

    return out[:batch].reshape(*lead, action_dim)


def init_dqn_params(key, state_dim, action_dim, num_layers=3, hidden_dim=256):
    """Deterministic init mirroring nn.Linear default U(-1/sqrt(fan_in), +1/sqrt(fan_in))."""
    dims = [state_dim] + [hidden_dim] * (num_layers - 1) + [action_dim]
    params = []
    for i in range(num_layers):
        fan_in, fan_out = dims[i], dims[i + 1]
        key, kw, kb = jax.random.split(key, 3)
        bound = 1.0 / jnp.sqrt(jnp.float32(fan_in))
        w = jax.random.uniform(kw, (fan_in, fan_out), jnp.float32, -bound, bound)
        b = jax.random.uniform(kb, (1, fan_out), jnp.float32, -bound, bound)
        params.append((w, b))
    return params


def dqn_reference_bf16(states, params):
    """Reference with the kernel's numerics: bf16 matmul inputs, f32 accumulate/elementwise."""
    h = states.astype(jnp.float32)
    for i, (w, b) in enumerate(params):
        h = jnp.dot(h.astype(jnp.bfloat16), w.astype(jnp.bfloat16),
                    preferred_element_type=jnp.float32) + b
        if i < len(params) - 1:
            h = jnp.maximum(h, 0.0)
    return h


def dqn_reference_f32(states, params):
    h = states
    for i, (w, b) in enumerate(params):
        h = h @ w + b
        if i < len(params) - 1:
            h = jnp.maximum(h, 0.0)
    return h


if __name__ == "__main__":
    # Small shapes consistent with the module: (*, S) states -> (*, A) Q-values.
    state_dim, action_dim, num_layers, hidden_dim = 16, 8, 3, 256

    key = jax.random.PRNGKey(0)
    key, kx = jax.random.split(key)
    # Two leading dims, 32 rows total -> 2 grid steps of tb=16.
    states = jax.random.normal(kx, (4, 8, state_dim), jnp.float32)

    params = init_dqn_params(key, state_dim, action_dim, num_layers, hidden_dim)
    weights, biases = prepare_dqn_params(params)   # one-time prep, outside the hot path

    q_vals = dqn_forward(states, weights, biases, action_dim=action_dim)
    q_vals = jax.block_until_ready(q_vals)
    assert q_vals.shape == (4, 8, action_dim)

    # Tight check vs a reference with identical bf16-input / f32-accumulate numerics.
    q_ref_bf16 = dqn_reference_bf16(states, params)
    assert jnp.allclose(q_vals, q_ref_bf16, atol=2e-3, rtol=2e-3), "mismatch vs bf16-path reference"

    # Loose check vs the pure-f32 reference (bf16 weight rounding only).
    q_ref_f32 = dqn_reference_f32(states, params)
    assert jnp.allclose(q_vals, q_ref_f32, atol=5e-2, rtol=5e-2), "mismatch vs f32 reference"

    print("KERNEL_OK")
</pallas_src>

<mosaic_0001>
module attributes {stable_mosaic.version = 11 : i64} {
  func.func @_dqn_kernel(%arg0: i32, %arg1: memref<16x16xf32, #tpu.memory_space<vmem>>, %arg2: memref<128x256xbf16, #tpu.memory_space<vmem>>, %arg3: memref<1x256xf32, #tpu.memory_space<vmem>>, %arg4: memref<256x256xbf16, #tpu.memory_space<vmem>>, %arg5: memref<1x256xf32, #tpu.memory_space<vmem>>, %arg6: memref<256x128xbf16, #tpu.memory_space<vmem>>, %arg7: memref<1x128xf32, #tpu.memory_space<vmem>>, %arg8: memref<16x8xf32, #tpu.memory_space<vmem>>, %arg9: memref<16x128xbf16, #tpu.memory_space<vmem>>) attributes {dimension_semantics = [#tpu.dimension_semantics<parallel>], iteration_bounds = array<i64: 2>, scalar_prefetch = 0 : i64, scratch_operands = 1 : i64, tpu.core_type = #tpu.core_type<tc>, window_params = [{transform_indices = @transform_0, window_bounds = array<i64: 16, 16>}, {pipeline_mode = #tpu.pipeline_mode<synchronous>, transform_indices = @transform_1, window_bounds = array<i64: 128, 256>}, {pipeline_mode = #tpu.pipeline_mode<synchronous>, transform_indices = @transform_2, window_bounds = array<i64: 1, 256>}, {pipeline_mode = #tpu.pipeline_mode<synchronous>, transform_indices = @transform_3, window_bounds = array<i64: 256, 256>}, {pipeline_mode = #tpu.pipeline_mode<synchronous>, transform_indices = @transform_4, window_bounds = array<i64: 1, 256>}, {pipeline_mode = #tpu.pipeline_mode<synchronous>, transform_indices = @transform_5, window_bounds = array<i64: 256, 128>}, {pipeline_mode = #tpu.pipeline_mode<synchronous>, transform_indices = @transform_6, window_bounds = array<i64: 1, 128>}, {transform_indices = @transform_7, window_bounds = array<i64: 16, 8>}]} {
    %cst = arith.constant 0.000000e+00 : bf16
    %0 = vector.broadcast %cst : bf16 to vector<16x128xbf16>
    %c0 = arith.constant 0 : index
    %c0_0 = arith.constant 0 : index
    %1 = vector.load %arg9[%c0, %c0_0] : memref<16x128xbf16, #tpu.memory_space<vmem>>, vector<16x128xbf16>
    tpu.vector_store %arg9[%c0, %c0_0], %0 {strides = array<i32>} : memref<16x128xbf16, #tpu.memory_space<vmem>>, vector<16x128xbf16>,
    %c0_1 = arith.constant 0 : index
    %c0_2 = arith.constant 0 : index
    %2 = vector.load %arg1[%c0_1, %c0_2] : memref<16x16xf32, #tpu.memory_space<vmem>>, vector<16x16xf32>
    %3 = arith.truncf %2 : vector<16x16xf32> to vector<16x16xbf16>
    %c0_3 = arith.constant 0 : index
    %c0_4 = arith.constant 0 : index
    %4 = vector.load %arg9[%c0_3, %c0_4] : memref<16x128xbf16, #tpu.memory_space<vmem>>, vector<16x16xbf16>
    tpu.vector_store %arg9[%c0_3, %c0_4], %3 {strides = array<i32>} : memref<16x128xbf16, #tpu.memory_space<vmem>>, vector<16x16xbf16>,
    %c0_5 = arith.constant 0 : index
    %c0_6 = arith.constant 0 : index
    %5 = vector.load %arg9[%c0_5, %c0_6] : memref<16x128xbf16, #tpu.memory_space<vmem>>, vector<16x128xbf16>
    %c0_7 = arith.constant 0 : index
    %c0_8 = arith.constant 0 : index
    %6 = vector.load %arg2[%c0_7, %c0_8] : memref<128x256xbf16, #tpu.memory_space<vmem>>, vector<128x256xbf16>
    %c0_9 = arith.constant 0 : index
    %c0_10 = arith.constant 0 : index
    %7 = vector.load %arg3[%c0_9, %c0_10] : memref<1x256xf32, #tpu.memory_space<vmem>>, vector<1x256xf32>
    %cst_11 = arith.constant dense<0.000000e+00> : vector<16x256xf32>
    %8 = tpu.matmul %5, %6, %cst_11 {dimension_numbers = #tpu.dot_dimension_numbers<[1], [0], [0], [1], [0, 0, 1, 1], [], []>} : vector<16x128xbf16>, vector<128x256xbf16>, vector<16x256xf32> -> vector<16x256xf32>
    %9 = vector.broadcast %7 : vector<1x256xf32> to vector<16x256xf32>
    %10 = arith.addf %8, %9 : vector<16x256xf32>
    %cst_12 = arith.constant 0.000000e+00 : f32
    %11 = vector.broadcast %cst_12 : f32 to vector<16x256xf32>
    %12 = arith.maximumf %10, %11 : vector<16x256xf32>
    %13 = arith.truncf %12 : vector<16x256xf32> to vector<16x256xbf16>
    %c0_13 = arith.constant 0 : index
    %c0_14 = arith.constant 0 : index
    %14 = vector.load %arg4[%c0_13, %c0_14] : memref<256x256xbf16, #tpu.memory_space<vmem>>, vector<256x256xbf16>
    %c0_15 = arith.constant 0 : index
    %c0_16 = arith.constant 0 : index
    %15 = vector.load %arg5[%c0_15, %c0_16] : memref<1x256xf32, #tpu.memory_space<vmem>>, vector<1x256xf32>
    %cst_17 = arith.constant dense<0.000000e+00> : vector<16x256xf32>
    %16 = tpu.matmul %13, %14, %cst_17 {dimension_numbers = #tpu.dot_dimension_numbers<[1], [0], [0], [1], [0, 0, 1, 1], [], []>} : vector<16x256xbf16>, vector<256x256xbf16>, vector<16x256xf32> -> vector<16x256xf32>
    %17 = vector.broadcast %15 : vector<1x256xf32> to vector<16x256xf32>
    %18 = arith.addf %16, %17 : vector<16x256xf32>
    %cst_18 = arith.constant 0.000000e+00 : f32
    %19 = vector.broadcast %cst_18 : f32 to vector<16x256xf32>
    %20 = arith.maximumf %18, %19 : vector<16x256xf32>
    %21 = arith.truncf %20 : vector<16x256xf32> to vector<16x256xbf16>
    %c0_19 = arith.constant 0 : index
    %c0_20 = arith.constant 0 : index
    %22 = vector.load %arg6[%c0_19, %c0_20] : memref<256x128xbf16, #tpu.memory_space<vmem>>, vector<256x128xbf16>
    %c0_21 = arith.constant 0 : index
    %c0_22 = arith.constant 0 : index
    %23 = vector.load %arg7[%c0_21, %c0_22] : memref<1x128xf32, #tpu.memory_space<vmem>>, vector<1x128xf32>
    %cst_23 = arith.constant dense<0.000000e+00> : vector<16x128xf32>
    %24 = tpu.matmul %21, %22, %cst_23 {dimension_numbers = #tpu.dot_dimension_numbers<[1], [0], [0], [1], [0, 0, 1, 1], [], []>} : vector<16x256xbf16>, vector<256x128xbf16>, vector<16x128xf32> -> vector<16x128xf32>
    %25 = vector.broadcast %23 : vector<1x128xf32> to vector<16x128xf32>
    %26 = arith.addf %24, %25 : vector<16x128xf32>
    %27 = vector.extract_strided_slice %26 {offsets = [0, 0], sizes = [16, 8], strides = [1, 1]} : vector<16x128xf32> to vector<16x8xf32>
    %c0_24 = arith.constant 0 : index
    %c0_25 = arith.constant 0 : index
    %28 = vector.load %arg8[%c0_24, %c0_25] : memref<16x8xf32, #tpu.memory_space<vmem>>, vector<16x8xf32>
    tpu.vector_store %arg8[%c0_24, %c0_25], %27 {strides = array<i32>} : memref<16x8xf32, #tpu.memory_space<vmem>>, vector<16x8xf32>,
    return
  }
  func.func @transform_0(%arg0: i32) -> (i32, i32) {
    %c0_i32 = arith.constant 0 : i32
    %c0_i32_0 = arith.constant 0 : i32
    return %arg0, %c0_i32 : i32, i32
  }
  func.func @transform_1(%arg0: i32) -> (i32, i32) {
    %c0_i32 = arith.constant 0 : i32
    %c0_i32_0 = arith.constant 0 : i32
    %c0_i32_1 = arith.constant 0 : i32
    return %c0_i32, %c0_i32_0 : i32, i32
  }
  func.func @transform_2(%arg0: i32) -> (i32, i32) {
    %c0_i32 = arith.constant 0 : i32
    %c0_i32_0 = arith.constant 0 : i32
    %c0_i32_1 = arith.constant 0 : i32
    return %c0_i32, %c0_i32_0 : i32, i32
  }
  func.func @transform_3(%arg0: i32) -> (i32, i32) {
    %c0_i32 = arith.constant 0 : i32
    %c0_i32_0 = arith.constant 0 : i32
    %c0_i32_1 = arith.constant 0 : i32
    return %c0_i32, %c0_i32_0 : i32, i32
  }
  func.func @transform_4(%arg0: i32) -> (i32, i32) {
    %c0_i32 = arith.constant 0 : i32
    %c0_i32_0 = arith.constant 0 : i32
    %c0_i32_1 = arith.constant 0 : i32
    return %c0_i32, %c0_i32_0 : i32, i32
  }
  func.func @transform_5(%arg0: i32) -> (i32, i32) {
    %c0_i32 = arith.constant 0 : i32
    %c0_i32_0 = arith.constant 0 : i32
    %c0_i32_1 = arith.constant 0 : i32
    return %c0_i32, %c0_i32_0 : i32, i32
  }
  func.func @transform_6(%arg0: i32) -> (i32, i32) {
    %c0_i32 = arith.constant 0 : i32
    %c0_i32_0 = arith.constant 0 : i32
    %c0_i32_1 = arith.constant 0 : i32
    return %c0_i32, %c0_i32_0 : i32, i32
  }
  func.func @transform_7(%arg0: i32) -> (i32, i32) {
    %c0_i32 = arith.constant 0 : i32
    %c0_i32_0 = arith.constant 0 : i32
    return %arg0, %c0_i32 : i32, i32
  }
}

</mosaic_0001>

<llo_original>
// kernel: dqn_forward.1
$region0: #{dqn_forward.1}
  #allocation0 [shape = 'u32[]', space=smem, size = 0x4, offset = 0x4, fixed_abs, tag = 'smem constant byte address 0x4 - core index']
  #allocation1 [shape = 'u32[144,128]{1,0:T(1,128)}', space=vmem, size = 0x12000, scoped, tag = 'internal scratch']
  #allocation2 [shape = 'bf16[16,128]{1,0:T(8,128)(2,1)}', space=vmem, size = 0x1000, scoped, tag = 'scratch operand']
  %s0 = inlined_call_operand.hbm [shape: f32[32,16], index: 0, kind: input, shape index: {}]
  %s1 = inlined_call_operand.hbm [shape: bf16[128,256], index: 1, kind: input, shape index: {}]
  %s2 = inlined_call_operand.vmem [shape: f32[1,256], index: 2, kind: input, shape index: {}]
  %s3 = inlined_call_operand.hbm [shape: bf16[256,256], index: 3, kind: input, shape index: {}]
  %s4 = inlined_call_operand.vmem [shape: f32[1,256], index: 4, kind: input, shape index: {}]
  %s5 = inlined_call_operand.hbm [shape: bf16[256,128], index: 5, kind: input, shape index: {}]
  %s6 = inlined_call_operand.vmem [shape: f32[1,128], index: 6, kind: input, shape index: {}]
  %s7 = inlined_call_operand.hbm [shape: f32[32,8], index: 7, kind: output, shape index: {}]
  %s8 = sld [smem:[#allocation0]]
  $region77: #{dqn_forward.1} parent=0
    _
  %s10 = ssub.s32 1, %s8
  %s11 = scalar_select 0, %s10, %s8
  $region1: #{dqn_forward.1} parent=0
    #allocation3 [shape = 'u8[16384]{0}', space=vmem, size = 0x4000, scoped, tag = 'input window, operand 0']
    #allocation4 [shape = 's32[2]{0}', space=sflag, size = 0x8, scoped, tag = 'scoped memory for dqn_forward.1']
    #allocation5 [shape = 's32[2]{0}', space=sflag, size = 0x8, scoped, tag = 'scoped memory for dqn_forward.1']
    #allocation6 [shape = 'u8[65536]{0}', space=vmem, size = 0x10000, scoped, tag = 'input window, operand 1, single buffered']
    #allocation7 [shape = 's32[1]{0}', space=sflag, size = 0x4, scoped, tag = 'scoped memory for dqn_forward.1']
    #allocation8 [shape = 'u8[131072]{0}', space=vmem, size = 0x20000, scoped, tag = 'input window, operand 3, single buffered']
    #allocation9 [shape = 'u8[65536]{0}', space=vmem, size = 0x10000, scoped, tag = 'input window, operand 5, single buffered']
    #allocation10 [shape = 's32[1]{0}', space=sflag, size = 0x4, scoped, tag = 'scoped memory for dqn_forward.1']
    #allocation11 [shape = 'u8[16384]{0}', space=vmem, size = 0x4000, scoped, tag = 'output window, operand 0']
    %12 = vsyncpa [#allocation4], 0
    %s13 = scalar_lea.sflag [#allocation4], 1
    %14 = vsyncpa %s13, 0
    %15 = vsyncpa [#allocation7], 0
    %16 = vsyncpa [#allocation10], 0
    %17 = vsyncpa [#allocation5], 0
    %s18 = scalar_lea.sflag [#allocation5], 1
    %19 = vsyncpa %s18, 0
    loop: start=0, step=1, limit=4
    $region2: #{dqn_forward.1} parent=1 // loop_pre_header
      _
    $region3: #{dqn_forward.1} parent=1 // loop_header
      %s21 = sphi 0, %s25
      %p22 = scmp.ge.s32.totalorder %s21, 4
      %s31 = sphi 0, %s33
      %s34 = sphi 0, %s31
      %s35 = sphi 0, %s34
      %s51 = sphi 0, %s35
      %s55 = sphi 0, %s55
      %s57 = sphi 0, %s55
      %s58 = sphi 0, %s57
      %s72 = sphi 0, %s58
      %s76 = sphi 0, %s76
      %s78 = sphi 0, %s76
      %s79 = sphi 0, %s78
      %s93 = sphi 0, %s79
      %s97 = sphi 0, %s97
      %s99 = sphi 0, %s97
      %s100 = sphi 0, %s99
      %s114 = sphi 0, %s100
      %s118 = sphi 0, %s118
      %s120 = sphi 0, %s118
      %s121 = sphi 0, %s120
      %s135 = sphi 0, %s121
      %s139 = sphi 0, %s139
      %s141 = sphi 0, %s139
      %s142 = sphi 0, %s141
      %s156 = sphi 0, %s142
      %s160 = sphi 0, %s160
      %s162 = sphi 0, %s160
      %s163 = sphi 0, %s162
      %s177 = sphi 0, %s163
      %s183 = sphi 0, %s185
      %s186 = sphi 0, %s183
      %s187 = sphi 0, %s186
      %s203 = sphi 0, %s187
    $region4: #{dqn_forward.1} parent=1 // loop_header_branch
      %24 = sbr.rel (%p22) target = $region8
    $region5: #{dqn_forward.1} parent=1 // loop_body
      %s26 = ssub.s32 %s21, 1
      %s27 = ssub.s32 %s21, 2
      %s28 = sadd.s32 %s21, 1
      %s29 = ssub.s32 %s21, %s28
      %p30 = scmp.eq.s32.totalorder %s29, 0
      %s32 = sadd.s32 %s31, 1
      %s33 = scalar_select %p30, %s31, %s32
      %p36 = pneg %p30
      %p37 = scmp.eq.s32.totalorder %s21, 1
      %p38 = por %p36, %p37
      %p39 = scmp.ne.s32.totalorder %s31, %s34
      %p40 = scmp.eq.s32.totalorder %s21, 0
      %p41 = por %p39, %p40
      %p42 = scmp.ne.s32.totalorder %s31, %s34
      %p43 = scmp.eq.s32.totalorder %s26, 1
      %p44 = por %p42, %p43
      %p45 = scmp.ne.s32.totalorder %s34, %s35
      %p46 = scmp.eq.s32.totalorder %s26, 0
      %p47 = por %p45, %p46
      %p48 = scmp.ne.s32.totalorder %s34, %s35
      %p49 = scmp.eq.s32.totalorder %s27, 1
      %p50 = por %p48, %p49
      %p52 = scmp.ne.s32.totalorder %s35, %s51
      %p53 = scmp.eq.s32.totalorder %s27, 0
      %p54 = por %p52, %p53
      %s56 = sadd.s32 %s55, 1
      %p59 = scmp.eq.s32.totalorder %s21, 1
      %p60 = scmp.ne.s32.totalorder %s55, %s57
      %p61 = scmp.eq.s32.totalorder %s21, 0
      %p62 = por %p60, %p61
      %p63 = scmp.ne.s32.totalorder %s55, %s57
      %p64 = scmp.eq.s32.totalorder %s26, 1
      %p65 = por %p63, %p64
      %p66 = scmp.ne.s32.totalorder %s57, %s58
      %p67 = scmp.eq.s32.totalorder %s26, 0
      %p68 = por %p66, %p67
      %p69 = scmp.ne.s32.totalorder %s57, %s58
      %p70 = scmp.eq.s32.totalorder %s27, 1
      %p71 = por %p69, %p70
      %p73 = scmp.ne.s32.totalorder %s58, %s72
      %p74 = scmp.eq.s32.totalorder %s27, 0
      %p75 = por %p73, %p74
      %s77 = sadd.s32 %s76, 1
      %p80 = scmp.eq.s32.totalorder %s21, 1
      %p81 = scmp.ne.s32.totalorder %s76, %s78
      %p82 = scmp.eq.s32.totalorder %s21, 0
      %p83 = por %p81, %p82
      %p84 = scmp.ne.s32.totalorder %s76, %s78
      %p85 = scmp.eq.s32.totalorder %s26, 1
      %p86 = por %p84, %p85
      %p87 = scmp.ne.s32.totalorder %s78, %s79
      %p88 = scmp.eq.s32.totalorder %s26, 0
      %p89 = por %p87, %p88
      %p90 = scmp.ne.s32.totalorder %s78, %s79
      %p91 = scmp.eq.s32.totalorder %s27, 1
      %p92 = por %p90, %p91
      %p94 = scmp.ne.s32.totalorder %s79, %s93
      %p95 = scmp.eq.s32.totalorder %s27, 0
      %p96 = por %p94, %p95
      %s98 = sadd.s32 %s97, 1
      %p101 = scmp.eq.s32.totalorder %s21, 1
      %p102 = scmp.ne.s32.totalorder %s97, %s99
      %p103 = scmp.eq.s32.totalorder %s21, 0
      %p104 = por %p102, %p103
      %p105 = scmp.ne.s32.totalorder %s97, %s99
      %p106 = scmp.eq.s32.totalorder %s26, 1
      %p107 = por %p105, %p106
      %p108 = scmp.ne.s32.totalorder %s99, %s100
      %p109 = scmp.eq.s32.totalorder %s26, 0
      %p110 = por %p108, %p109
      %p111 = scmp.ne.s32.totalorder %s99, %s100
      %p112 = scmp.eq.s32.totalorder %s27, 1
      %p113 = por %p111, %p112
      %p115 = scmp.ne.s32.totalorder %s100, %s114
      %p116 = scmp.eq.s32.totalorder %s27, 0
      %p117 = por %p115, %p116
      %s119 = sadd.s32 %s118, 1
      %p122 = scmp.eq.s32.totalorder %s21, 1
      %p123 = scmp.ne.s32.totalorder %s118, %s120
      %p124 = scmp.eq.s32.totalorder %s21, 0
      %p125 = por %p123, %p124
      %p126 = scmp.ne.s32.totalorder %s118, %s120
      %p127 = scmp.eq.s32.totalorder %s26, 1
      %p128 = por %p126, %p127
      %p129 = scmp.ne.s32.totalorder %s120, %s121
      %p130 = scmp.eq.s32.totalorder %s26, 0
      %p131 = por %p129, %p130
      %p132 = scmp.ne.s32.totalorder %s120, %s121
      %p133 = scmp.eq.s32.totalorder %s27, 1
      %p134 = por %p132, %p133
      %p136 = scmp.ne.s32.totalorder %s121, %s135
      %p137 = scmp.eq.s32.totalorder %s27, 0
      %p138 = por %p136, %p137
      %s140 = sadd.s32 %s139, 1
      %p143 = scmp.eq.s32.totalorder %s21, 1
      %p144 = scmp.ne.s32.totalorder %s139, %s141
      %p145 = scmp.eq.s32.totalorder %s21, 0
      %p146 = por %p144, %p145
      %p147 = scmp.ne.s32.totalorder %s139, %s141
      %p148 = scmp.eq.s32.totalorder %s26, 1
      %p149 = por %p147, %p148
      %p150 = scmp.ne.s32.totalorder %s141, %s142
      %p151 = scmp.eq.s32.totalorder %s26, 0
      %p152 = por %p150, %p151
      %p153 = scmp.ne.s32.totalorder %s141, %s142
      %p154 = scmp.eq.s32.totalorder %s27, 1
      %p155 = por %p153, %p154
      %p157 = scmp.ne.s32.totalorder %s142, %s156
      %p158 = scmp.eq.s32.totalorder %s27, 0
      %p159 = por %p157, %p158
      %s161 = sadd.s32 %s160, 1
      %p164 = scmp.eq.s32.totalorder %s21, 1
      %p165 = scmp.ne.s32.totalorder %s160, %s162
      %p166 = scmp.eq.s32.totalorder %s21, 0
      %p167 = por %p165, %p166
      %p168 = scmp.ne.s32.totalorder %s160, %s162
      %p169 = scmp.eq.s32.totalorder %s26, 1
      %p170 = por %p168, %p169
      %p171 = scmp.ne.s32.totalorder %s162, %s163
      %p172 = scmp.eq.s32.totalorder %s26, 0
      %p173 = por %p171, %p172
      %p174 = scmp.ne.s32.totalorder %s162, %s163
      %p175 = scmp.eq.s32.totalorder %s27, 1
      %p176 = por %p174, %p175
      %p178 = scmp.ne.s32.totalorder %s163, %s177
      %p179 = scmp.eq.s32.totalorder %s27, 0
      %p180 = por %p178, %p179
      %s181 = ssub.s32 %s21, %s28
      %p182 = scmp.eq.s32.totalorder %s181, 0
      %s184 = sadd.s32 %s183, 1
      %s185 = scalar_select %p182, %s183, %s184
      %p188 = pneg %p182
      %p189 = scmp.eq.s32.totalorder %s21, 1
      %p190 = por %p188, %p189
      %p191 = scmp.ne.s32.totalorder %s183, %s186
      %p192 = scmp.eq.s32.totalorder %s21, 0
      %p193 = por %p191, %p192
      %p194 = scmp.ne.s32.totalorder %s183, %s186
      %p195 = scmp.eq.s32.totalorder %s26, 1
      %p196 = por %p194, %p195
      %p197 = scmp.ne.s32.totalorder %s186, %s187
      %p198 = scmp.eq.s32.totalorder %s26, 0
      %p199 = por %p197, %p198
      %p200 = scmp.ne.s32.totalorder %s186, %s187
      %p201 = scmp.eq.s32.totalorder %s27, 1
      %p202 = por %p200, %p201
      %p204 = scmp.ne.s32.totalorder %s187, %s203
      %p205 = scmp.eq.s32.totalorder %s27, 0
      %p206 = por %p204, %p205
      %p207 = scmp.le.s32.totalorder 1, %s21
      %p208 = scmp.lt.s32.totalorder %s21, 3
      %p209 = pnand %p207, %p208
      %p210 = pneg %p209
      // Predicated region
      $region9: #{dqn_forward.1} parent=5 // pred_check
        _
      $region10: #{dqn_forward.1} parent=5 // pred_check_branch
        %212 = sbr.rel (%p209) target = $region12
      $region11: #{dqn_forward.1} parent=5 // pred_region
        %s213 = ssub.s32 %s21, 1
        // Predicated region
        $region13: #{dqn_forward.1} parent=11 // pred_check
          %p214 = pneg %p68
        $region14: #{dqn_forward.1} parent=11 // pred_check_branch
          %216 = sbr.rel (%p214) target = $region16
        $region15: #{dqn_forward.1} parent=11 // pred_region
          %s218 = ssub.s32 2048, 2048
          %219 = vsyncadd [#allocation7], %s218
          %s220 = sshll.u32 [#allocation6], 4
          %s221 = int_to_ptr.vmem [resolvable:$true] %s220
          %226 = dma.hbm_to_vmem [thread:$0]  %s1, 2048, %s221, [#allocation7], 128, 128, 8
        $region16: #{dqn_forward.1} parent=11 // pred_fallthru
          _
        // Predicated region
        $region17: #{dqn_forward.1} parent=11 // pred_check
          %p227 = pneg %p89
        $region18: #{dqn_forward.1} parent=11 // pred_check_branch
          %229 = sbr.rel (%p227) target = $region20
        $region19: #{dqn_forward.1} parent=11 // pred_region
          _
        $region20: #{dqn_forward.1} parent=11 // pred_fallthru
          _
        // Predicated region
        $region21: #{dqn_forward.1} parent=11 // pred_check
          %p230 = pneg %p110
        $region22: #{dqn_forward.1} parent=11 // pred_check_branch
          %232 = sbr.rel (%p230) target = $region24
        $region23: #{dqn_forward.1} parent=11 // pred_region
          %s234 = ssub.s32 4096, 4096
          %235 = vsyncadd [#allocation7], %s234
          %s236 = sshll.u32 [#allocation8], 4
          %s237 = int_to_ptr.vmem [resolvable:$true] %s236
          %242 = dma.hbm_to_vmem [thread:$0]  %s3, 4096, %s237, [#allocation7], 128, 128, 8
        $region24: #{dqn_forward.1} parent=11 // pred_fallthru
          _
        // Predicated region
        $region25: #{dqn_forward.1} parent=11 // pred_check
          %p243 = pneg %p131
        $region26: #{dqn_forward.1} parent=11 // pred_check_branch
          %245 = sbr.rel (%p243) target = $region28
        $region27: #{dqn_forward.1} parent=11 // pred_region
          _
        $region28: #{dqn_forward.1} parent=11 // pred_fallthru
          _
        // Predicated region
        $region29: #{dqn_forward.1} parent=11 // pred_check
          %p246 = pneg %p152
        $region30: #{dqn_forward.1} parent=11 // pred_check_branch
          %248 = sbr.rel (%p246) target = $region32
        $region31: #{dqn_forward.1} parent=11 // pred_region
          %s250 = ssub.s32 2048, 2048
          %251 = vsyncadd [#allocation10], %s250
          %s252 = sshll.u32 [#allocation9], 4
          %s253 = int_to_ptr.vmem [resolvable:$true] %s252
          %258 = dma.hbm_to_vmem [thread:$0]  %s5, 2048, %s253, [#allocation10], 64, 64, 4
        $region32: #{dqn_forward.1} parent=11 // pred_fallthru
          _
        // Predicated region
        $region33: #{dqn_forward.1} parent=11 // pred_check
          %p259 = pneg %p173
        $region34: #{dqn_forward.1} parent=11 // pred_check_branch
          %261 = sbr.rel (%p259) target = $region36
        $region35: #{dqn_forward.1} parent=11 // pred_region
          _
        $region36: #{dqn_forward.1} parent=11 // pred_fallthru
          _
      $region12: #{dqn_forward.1} parent=5 // pred_fallthru
        _
      %p262 = scmp.lt.s32.totalorder %s21, 2
      // Predicated region
      $region37: #{dqn_forward.1} parent=5 // pred_check
        %p263 = pneg %p262
      $region38: #{dqn_forward.1} parent=5 // pred_check_branch
        %265 = sbr.rel (%p263) target = $region40
      $region39: #{dqn_forward.1} parent=5 // pred_region
        // Predicated region
        $region41: #{dqn_forward.1} parent=39 // pred_check
          %p266 = pneg %p41
        $region42: #{dqn_forward.1} parent=39 // pred_check_branch
          %268 = sbr.rel (%p266) target = $region44
        $region43: #{dqn_forward.1} parent=39 // pred_region
          %s269 = sand.u32 %s31, 1
          %s270 = scalar_lea.sflag [#allocation4], %s269
          %s271 = sand.u32 %s31, 1
          %s272 = smul.addr %s271, 16
          %s273 = scalar_lea.vmem [#allocation3], %s272
          %s274 = smul.u32 2, %s21
          %s276 = ssub.s32 256, 256
          %277 = vsyncadd %s270, %s276
          %s278 = smul.addr %s274, 128
          %s279 = scalar_lea.hbm %s0, %s278
          %s280 = sshll.u32 %s273, 4
          %s281 = int_to_ptr.vmem [resolvable:$true] %s280
          %286 = dma.hbm_to_vmem [thread:$0]  %s279, 256, %s281, %s270, 128, 128, 8
        $region44: #{dqn_forward.1} parent=39 // pred_fallthru
          _
      $region40: #{dqn_forward.1} parent=5 // pred_fallthru
        _
      %p287 = scmp.le.s32.totalorder 1, %s21
      %p288 = scmp.lt.s32.totalorder %s21, 3
      %p289 = pnand %p287, %p288
      %p290 = pneg %p289
      // Predicated region
      $region45: #{dqn_forward.1} parent=5 // pred_check
        _
      $region46: #{dqn_forward.1} parent=5 // pred_check_branch
        %292 = sbr.rel (%p289) target = $region48
      $region47: #{dqn_forward.1} parent=5 // pred_region
        %s293 = ssub.s32 %s21, 1
        %s294 = sand.u32 %s34, 1
        %s295 = scalar_lea.sflag [#allocation4], %s294
        %s296 = sand.u32 %s34, 1
        %s297 = smul.addr %s296, 16
        %s298 = scalar_lea.vmem [#allocation3], %s297
        // Predicated region
        $region49: #{dqn_forward.1} parent=47 // pred_check
          %p299 = pneg %p47
        $region50: #{dqn_forward.1} parent=47 // pred_check_branch
          %301 = sbr.rel (%p299) target = $region52
        $region51: #{dqn_forward.1} parent=47 // pred_region
          %302 = dma.done %s295, 256
        $region52: #{dqn_forward.1} parent=47 // pred_fallthru
          _
        // Predicated region
        $region53: #{dqn_forward.1} parent=47 // pred_check
          %p303 = pneg %p68
        $region54: #{dqn_forward.1} parent=47 // pred_check_branch
          %305 = sbr.rel (%p303) target = $region56
        $region55: #{dqn_forward.1} parent=47 // pred_region
          %306 = dma.done [#allocation7], 2048
        $region56: #{dqn_forward.1} parent=47 // pred_fallthru
          _
        // Predicated region
        $region57: #{dqn_forward.1} parent=47 // pred_check
          %p307 = pneg %p110
        $region58: #{dqn_forward.1} parent=47 // pred_check_branch
          %309 = sbr.rel (%p307) target = $region60
        $region59: #{dqn_forward.1} parent=47 // pred_region
          %310 = dma.done [#allocation7], 4096
        $region60: #{dqn_forward.1} parent=47 // pred_fallthru
          _
        // Predicated region
        $region61: #{dqn_forward.1} parent=47 // pred_check
          %p311 = pneg %p152
        $region62: #{dqn_forward.1} parent=47 // pred_check_branch
          %313 = sbr.rel (%p311) target = $region64
        $region63: #{dqn_forward.1} parent=47 // pred_region
          %314 = dma.done [#allocation10], 2048
        $region64: #{dqn_forward.1} parent=47 // pred_fallthru
          _
        %s315 = sand.u32 %s34, 1
        %s316 = scalar_lea.sflag [#allocation4], %s315
        %s317 = sand.u32 %s34, 1
        %s318 = smul.addr %s317, 16
        %s319 = scalar_lea.vmem [#allocation3], %s318
        %p320 = pneg %p47
        %p321 = pneg %p44
        %p322 = pneg %p68
        %p323 = pneg %p65
        %p324 = pneg %p89
        %p325 = pneg %p86
        %p326 = pneg %p110
        %p327 = pneg %p107
        %p328 = pneg %p131
        %p329 = pneg %p128
        %p330 = pneg %p152
        %p331 = pneg %p149
        %p332 = pneg %p173
        %p333 = pneg %p170
        %p334 = pneg %p199
        %p335 = pneg %p196
        %s336 = sand.u32 %s186, 1
        %s337 = scalar_lea.sflag [#allocation5], %s336
        %s338 = sand.u32 %s186, 1
        %s339 = smul.addr %s338, 16
        %s340 = scalar_lea.vmem [#allocation11], %s339
        %s341 = smul.u32 2, %s26
        %s342 = smul.u32 2, %s26
        %344 = vst [vmem:[#allocation2] sm:$0xf] 0
        %345 = vst [vmem:[#allocation2 + $0x4] sm:$0xf] 0
        %v346 = vld [vmem:[%s298] sm:$0xff]
        %v347 = vld [vmem:[%s298 + $0x8] sm:$0xff]
        %v348 = vpack.c.bf16 %v347, %v346
        %v350 = vunpack.c.l.b16 %v348
        %v351 = vunpack.c.h.b16 %v348
        %v352 = vpack.c.b16 %v350, %v350
        %v353 = vpack.c.b16 %v351, %v351
        %vm356 = vcmask 125952
        %357 = vst.msk [vmem:[#allocation2] sm:$0xf] %vm356, %v352
        %358 = vst.msk [vmem:[#allocation2 + $0x4] sm:$0xf] %vm356, %v353
        %v359 = vld [vmem:[#allocation2] sm:$0xf]
        %v360 = vld [vmem:[#allocation2 + $0x4] sm:$0xf]
        %v361 = vld [vmem:[#allocation6] sm:$0xff]
        %v362 = vld [vmem:[#allocation6 + $0x8] sm:$0xff]
        %v363 = vld [vmem:[#allocation6 + $0x10] sm:$0xff]
        %v364 = vld [vmem:[#allocation6 + $0x18] sm:$0xff]
        %v365 = vld [vmem:[#allocation6 + $0x20] sm:$0xff]
        %v366 = vld [vmem:[#allocation6 + $0x28] sm:$0xff]
        %v367 = vld [vmem:[#allocation6 + $0x30] sm:$0xff]
        %v368 = vld [vmem:[#allocation6 + $0x38] sm:$0xff]
        %v369 = vld [vmem:[#allocation6 + $0x40] sm:$0xff]
        %v370 = vld [vmem:[#allocation6 + $0x48] sm:$0xff]
        %v371 = vld [vmem:[#allocation6 + $0x50] sm:$0xff]
        %v372 = vld [vmem:[#allocation6 + $0x58] sm:$0xff]
        %v373 = vld [vmem:[#allocation6 + $0x60] sm:$0xff]
        %v374 = vld [vmem:[#allocation6 + $0x68] sm:$0xff]
        %v375 = vld [vmem:[#allocation6 + $0x70] sm:$0xff]
        %v376 = vld [vmem:[#allocation6 + $0x78] sm:$0xff]
        %v377 = vld [vmem:[%s2] sm:$0x3]
        %v379 = vlaneseq
        %v380 = vshrl.u32 %v379, 7
        %v381 = vsub.s32 0, %v380
        %v382 = vrot.slane %v377, %v381
        %v383 = vlaneseq
        %v384 = vshrl.u32 %v383, 7
        %v385 = vsub.s32 1, %v384
        %v386 = vrot.slane %v377, %v385
        %v391 = vunpack.c.l.b16 %v359
        %v392 = vunpack.c.l.b16 %v360
        %v393 = vpack.c.b16 %v392, %v391
        %v411 = vunpack.c.l.b16 %v361
        %v412 = vunpack.c.h.b16 %v361
        %v413 = vunpack.c.l.b16 %v362
        %v414 = vunpack.c.h.b16 %v362
        %v415 = vunpack.c.l.b16 %v363
        %v416 = vunpack.c.h.b16 %v363
        %v417 = vunpack.c.l.b16 %v364
        %v418 = vunpack.c.h.b16 %v364
        %v419 = vunpack.c.l.b16 %v365
        %v420 = vunpack.c.h.b16 %v365
        %v421 = vunpack.c.l.b16 %v366
        %v422 = vunpack.c.h.b16 %v366
        %v423 = vunpack.c.l.b16 %v367
        %v424 = vunpack.c.h.b16 %v367
        %v425 = vunpack.c.l.b16 %v368
        %v426 = vunpack.c.h.b16 %v368
        %v427 = vunpack.c.l.b16 %v369
        %v428 = vunpack.c.h.b16 %v369
        %v429 = vunpack.c.l.b16 %v370
        %v430 = vunpack.c.h.b16 %v370
        %v431 = vunpack.c.l.b16 %v371
        %v432 = vunpack.c.h.b16 %v371
        %v433 = vunpack.c.l.b16 %v372
        %v434 = vunpack.c.h.b16 %v372
        %v435 = vunpack.c.l.b16 %v373
        %v436 = vunpack.c.h.b16 %v373
        %v437 = vunpack.c.l.b16 %v374
        %v438 = vunpack.c.h.b16 %v374
        %v439 = vunpack.c.l.b16 %v375
        %v440 = vunpack.c.h.b16 %v375
        %v441 = vunpack.c.l.b16 %v376
        %v442 = vunpack.c.h.b16 %v376
        %v443 = vpack.c.b16 %v413, %v411
        %v444 = vpack.c.b16 %v414, %v412
        %v445 = vpack.c.b16 %v417, %v415
        %v446 = vpack.c.b16 %v418, %v416
        %v447 = vpack.c.b16 %v421, %v419
        %v448 = vpack.c.b16 %v422, %v420
        %v449 = vpack.c.b16 %v425, %v423
        %v450 = vpack.c.b16 %v426, %v424
        %v451 = vpack.c.b16 %v429, %v427
        %v452 = vpack.c.b16 %v430, %v428
        %v453 = vpack.c.b16 %v433, %v431
        %v454 = vpack.c.b16 %v434, %v432
        %v455 = vpack.c.b16 %v437, %v435
        %v456 = vpack.c.b16 %v438, %v436
        %v457 = vpack.c.b16 %v441, %v439
        %v458 = vpack.c.b16 %v442, %v440
        %475 = vmatprep.subr.bf16.mxu0 %v458
        %476 = vmatpush1.bf16.msra.mxu0 %v457
        %477 = vmatprep.subr.bf16.mxu0 %v456
        %478 = vmatpush1.bf16.msra.mxu0 %v455
        %479 = vmatprep.subr.bf16.mxu0 %v454
        %480 = vmatpush1.bf16.msra.mxu0 %v453
        %481 = vmatprep.subr.bf16.mxu0 %v452
        %482 = vmatpush1.bf16.msra.mxu0 %v451
        %483 = vmatprep.subr.bf16.mxu0 %v450
        %484 = vmatpush1.bf16.msra.mxu0 %v449
        %485 = vmatprep.subr.bf16.mxu0 %v448
        %486 = vmatpush1.bf16.msra.mxu0 %v447
        %487 = vmatprep.subr.bf16.mxu0 %v446
        %488 = vmatpush1.bf16.msra.mxu0 %v445
        %489 = vmatprep.subr.bf16.mxu0 %v444
        %490 = vmatpush1.bf16.msra.mxu0 %v443
        %491 = vmatprep.subr.bf16.mxu0 0
        %492 = vmatpush2.bf16.msra.mxu0 0
        %493 = vmatprep.subr.bf16.mxu0 0
        %494 = vmatpush2.bf16.msra.mxu0 0
        %495 = vmatprep.subr.bf16.mxu0 0
        %496 = vmatpush2.bf16.msra.mxu0 0
        %497 = vmatprep.subr.bf16.mxu0 0
        %498 = vmatpush2.bf16.msra.mxu0 0
        %499 = vmatprep.subr.bf16.mxu0 0
        %500 = vmatpush2.bf16.msra.mxu0 0
        %501 = vmatprep.subr.bf16.mxu0 0
        %502 = vmatpush2.bf16.msra.mxu0 0
        %503 = vmatprep.subr.bf16.mxu0 0
        %504 = vmatpush2.bf16.msra.mxu0 0
        %505 = vmatprep.subr.bf16.mxu0 0
        %506 = vmatpush2.bf16.msra.mxu0 0
        %507 = vmatprep.mubr.bf16.mxu0 0
        %508 = vmatmul.mubr.bf16.gmra.mxu0 %v393
        %v509 = vpop.f32.mrf.mxu0
        %v510 = vadd.f32 %v382, %v509
        %v511 = vpop.f32.mrf.mxu0
        %v512 = vadd.f32 %v386, %v511
        %v513 = vpop.f32.mrf.mxu0
        %v514 = vadd.f32 %v382, %v513
        %v515 = vpop.f32.mrf.mxu0
        %v516 = vadd.f32 %v386, %v515
        %517 = vdwg.mxu0
        %v518 = vmax.f32 %v510, 0.0
        %v519 = vmax.f32 %v512, 0.0
        %v520 = vmax.f32 %v514, 0.0
        %v521 = vmax.f32 %v516, 0.0
        %v522 = vpack.c.bf16 %v520, %v518
        %v523 = vpack.c.bf16 %v521, %v519
        %v524 = vld [vmem:[#allocation8] sm:$0xff]
        %v525 = vld [vmem:[#allocation8 + $0x8] sm:$0xff]
        %v526 = vld [vmem:[#allocation8 + $0x10] sm:$0xff]
        %v527 = vld [vmem:[#allocation8 + $0x18] sm:$0xff]
        %v528 = vld [vmem:[#allocation8 + $0x20] sm:$0xff]
        %v529 = vld [vmem:[#allocation8 + $0x28] sm:$0xff]
        %v530 = vld [vmem:[#allocation8 + $0x30] sm:$0xff]
        %v531 = vld [vmem:[#allocation8 + $0x38] sm:$0xff]
        %v532 = vld [vmem:[#allocation8 + $0x40] sm:$0xff]
        %v533 = vld [vmem:[#allocation8 + $0x48] sm:$0xff]
        %v534 = vld [vmem:[#allocation8 + $0x50] sm:$0xff]
        %v535 = vld [vmem:[#allocation8 + $0x58] sm:$0xff]
        %v536 = vld [vmem:[#allocation8 + $0x60] sm:$0xff]
        %v537 = vld [vmem:[#allocation8 + $0x68] sm:$0xff]
        %v538 = vld [vmem:[#allocation8 + $0x70] sm:$0xff]
        %v539 = vld [vmem:[#allocation8 + $0x78] sm:$0xff]
        %v540 = vld [vmem:[#allocation8 + $0x80] sm:$0xff]
        %v541 = vld [vmem:[#allocation8 + $0x88] sm:$0xff]
        %v542 = vld [vmem:[#allocation8 + $0x90] sm:$0xff]
        %v543 = vld [vmem:[#allocation8 + $0x98] sm:$0xff]
        %v544 = vld [vmem:[#allocation8 + $0xa0] sm:$0xff]
        %v545 = vld [vmem:[#allocation8 + $0xa8] sm:$0xff]
        %v546 = vld [vmem:[#allocation8 + $0xb0] sm:$0xff]
        %v547 = vld [vmem:[#allocation8 + $0xb8] sm:$0xff]
        %v548 = vld [vmem:[#allocation8 + $0xc0] sm:$0xff]
        %v549 = vld [vmem:[#allocation8 + $0xc8] sm:$0xff]
        %v550 = vld [vmem:[#allocation8 + $0xd0] sm:$0xff]
        %v551 = vld [vmem:[#allocation8 + $0xd8] sm:$0xff]
        %v552 = vld [vmem:[#allocation8 + $0xe0] sm:$0xff]
        %v553 = vld [vmem:[#allocation8 + $0xe8] sm:$0xff]
        %v554 = vld [vmem:[#allocation8 + $0xf0] sm:$0xff]
        %v555 = vld [vmem:[#allocation8 + $0xf8] sm:$0xff]
        %v556 = vld [vmem:[%s4] sm:$0x3]
        %v558 = vlaneseq
        %v559 = vshrl.u32 %v558, 7
        %v560 = vsub.s32 0, %v559
        %v561 = vrot.slane %v556, %v560
        %v562 = vlaneseq
        %v563 = vshrl.u32 %v562, 7
        %v564 = vsub.s32 1, %v563
        %v565 = vrot.slane %v556, %v564
        %v600 = vunpack.c.l.b16 %v524
        %v601 = vunpack.c.h.b16 %v524
        %v602 = vunpack.c.l.b16 %v525
        %v603 = vunpack.c.h.b16 %v525
        %v604 = vunpack.c.l.b16 %v526
        %v605 = vunpack.c.h.b16 %v526
        %v606 = vunpack.c.l.b16 %v527
        %v607 = vunpack.c.h.b16 %v527
        %v608 = vunpack.c.l.b16 %v528
        %v609 = vunpack.c.h.b16 %v528
        %v610 = vunpack.c.l.b16 %v529
        %v611 = vunpack.c.h.b16 %v529
        %v612 = vunpack.c.l.b16 %v530
        %v613 = vunpack.c.h.b16 %v530
        %v614 = vunpack.c.l.b16 %v531
        %v615 = vunpack.c.h.b16 %v531
        %v616 = vunpack.c.l.b16 %v532
        %v617 = vunpack.c.h.b16 %v532
        %v618 = vunpack.c.l.b16 %v533
        %v619 = vunpack.c.h.b16 %v533
        %v620 = vunpack.c.l.b16 %v534
        %v621 = vunpack.c.h.b16 %v534
        %v622 = vunpack.c.l.b16 %v535
        %v623 = vunpack.c.h.b16 %v535
        %v624 = vunpack.c.l.b16 %v536
        %v625 = vunpack.c.h.b16 %v536
        %v626 = vunpack.c.l.b16 %v537
        %v627 = vunpack.c.h.b16 %v537
        %v628 = vunpack.c.l.b16 %v538
        %v629 = vunpack.c.h.b16 %v538
        %v630 = vunpack.c.l.b16 %v539
        %v631 = vunpack.c.h.b16 %v539
        %v632 = vunpack.c.l.b16 %v540
        %v633 = vunpack.c.h.b16 %v540
        %v634 = vunpack.c.l.b16 %v541
        %v635 = vunpack.c.h.b16 %v541
        %v636 = vunpack.c.l.b16 %v542
        %v637 = vunpack.c.h.b16 %v542
        %v638 = vunpack.c.l.b16 %v543
        %v639 = vunpack.c.h.b16 %v543
        %v640 = vunpack.c.l.b16 %v544
        %v641 = vunpack.c.h.b16 %v544
        %v642 = vunpack.c.l.b16 %v545
        %v643 = vunpack.c.h.b16 %v545
        %v644 = vunpack.c.l.b16 %v546
        %v645 = vunpack.c.h.b16 %v546
        %v646 = vunpack.c.l.b16 %v547
        %v647 = vunpack.c.h.b16 %v547
        %v648 = vunpack.c.l.b16 %v548
        %v649 = vunpack.c.h.b16 %v548
        %v650 = vunpack.c.l.b16 %v549
        %v651 = vunpack.c.h.b16 %v549
        %v652 = vunpack.c.l.b16 %v550
        %v653 = vunpack.c.h.b16 %v550
        %v654 = vunpack.c.l.b16 %v551
        %v655 = vunpack.c.h.b16 %v551
        %v656 = vunpack.c.l.b16 %v552
        %v657 = vunpack.c.h.b16 %v552
        %v658 = vunpack.c.l.b16 %v553
        %v659 = vunpack.c.h.b16 %v553
        %v660 = vunpack.c.l.b16 %v554
        %v661 = vunpack.c.h.b16 %v554
        %v662 = vunpack.c.l.b16 %v555
        %v663 = vunpack.c.h.b16 %v555
        %v664 = vpack.c.b16 %v602, %v600
        %v665 = vpack.c.b16 %v603, %v601
        %v666 = vpack.c.b16 %v606, %v604
        %v667 = vpack.c.b16 %v607, %v605
        %v668 = vpack.c.b16 %v610, %v608
        %v669 = vpack.c.b16 %v611, %v609
        %v670 = vpack.c.b16 %v614, %v612
        %v671 = vpack.c.b16 %v615, %v613
        %v672 = vpack.c.b16 %v618, %v616
        %v673 = vpack.c.b16 %v619, %v617
        %v674 = vpack.c.b16 %v622, %v620
        %v675 = vpack.c.b16 %v623, %v621
        %v676 = vpack.c.b16 %v626, %v624
        %v677 = vpack.c.b16 %v627, %v625
        %v678 = vpack.c.b16 %v630, %v628
        %v679 = vpack.c.b16 %v631, %v629
        %v680 = vpack.c.b16 %v634, %v632
        %v681 = vpack.c.b16 %v635, %v633
        %v682 = vpack.c.b16 %v638, %v636
        %v683 = vpack.c.b16 %v639, %v637
        %v684 = vpack.c.b16 %v642, %v640
        %v685 = vpack.c.b16 %v643, %v641
        %v686 = vpack.c.b16 %v646, %v644
        %v687 = vpack.c.b16 %v647, %v645
        %v688 = vpack.c.b16 %v650, %v648
        %v689 = vpack.c.b16 %v651, %v649
        %v690 = vpack.c.b16 %v654, %v652
        %v691 = vpack.c.b16 %v655, %v653
        %v692 = vpack.c.b16 %v658, %v656
        %v693 = vpack.c.b16 %v659, %v657
        %v694 = vpack.c.b16 %v662, %v660
        %v695 = vpack.c.b16 %v663, %v661
        %728 = vmatprep.subr.bf16.mxu0 %v679
        %729 = vmatpush1.bf16.msra.mxu0 %v678
        %730 = vmatprep.subr.bf16.mxu0 %v677
        %731 = vmatpush1.bf16.msra.mxu0 %v676
        %732 = vmatprep.subr.bf16.mxu0 %v675
        %733 = vmatpush1.bf16.msra.mxu0 %v674
        %734 = vmatprep.subr.bf16.mxu0 %v673
        %735 = vmatpush1.bf16.msra.mxu0 %v672
        %736 = vmatprep.subr.bf16.mxu0 %v671
        %737 = vmatpush1.bf16.msra.mxu0 %v670
        %738 = vmatprep.subr.bf16.mxu0 %v669
        %739 = vmatpush1.bf16.msra.mxu0 %v668
        %740 = vmatprep.subr.bf16.mxu0 %v667
        %741 = vmatpush1.bf16.msra.mxu0 %v666
        %742 = vmatprep.subr.bf16.mxu0 %v665
        %743 = vmatpush1.bf16.msra.mxu0 %v664
        %744 = vmatprep.subr.bf16.mxu0 %v695
        %745 = vmatpush2.bf16.msra.mxu0 %v694
        %746 = vmatprep.subr.bf16.mxu0 %v693
        %747 = vmatpush2.bf16.msra.mxu0 %v692
        %748 = vmatprep.subr.bf16.mxu0 %v691
        %749 = vmatpush2.bf16.msra.mxu0 %v690
        %750 = vmatprep.subr.bf16.mxu0 %v689
        %751 = vmatpush2.bf16.msra.mxu0 %v688
        %752 = vmatprep.subr.bf16.mxu0 %v687
        %753 = vmatpush2.bf16.msra.mxu0 %v686
        %754 = vmatprep.subr.bf16.mxu0 %v685
        %755 = vmatpush2.bf16.msra.mxu0 %v684
        %756 = vmatprep.subr.bf16.mxu0 %v683
        %757 = vmatpush2.bf16.msra.mxu0 %v682
        %758 = vmatprep.subr.bf16.mxu0 %v681
        %759 = vmatpush2.bf16.msra.mxu0 %v680
        %760 = vmatprep.mubr.bf16.mxu0 %v523
        %761 = vmatmul.mubr.bf16.gmra.mxu0 %v522
        %v762 = vpop.f32.mrf.mxu0
        %v763 = vadd.f32 %v561, %v762
        %v764 = vpop.f32.mrf.mxu0
        %v765 = vadd.f32 %v565, %v764
        %v766 = vpop.f32.mrf.mxu0
        %v767 = vadd.f32 %v561, %v766
        %v768 = vpop.f32.mrf.mxu0
        %v769 = vadd.f32 %v565, %v768
        %770 = vdwg.mxu0
        %v771 = vmax.f32 %v763, 0.0
        %v772 = vmax.f32 %v765, 0.0
        %v773 = vmax.f32 %v767, 0.0
        %v774 = vmax.f32 %v769, 0.0
        %v775 = vpack.c.bf16 %v773, %v771
        %v776 = vpack.c.bf16 %v774, %v772
        %v777 = vld [vmem:[#allocation9] sm:$0xf]
        %v778 = vld [vmem:[#allocation9 + $0x4] sm:$0xf]
        %v779 = vld [vmem:[#allocation9 + $0x8] sm:$0xf]
        %v780 = vld [vmem:[#allocation9 + $0xc] sm:$0xf]
        %v781 = vld [vmem:[#allocation9 + $0x10] sm:$0xf]
        %v782 = vld [vmem:[#allocation9 + $0x14] sm:$0xf]
        %v783 = vld [vmem:[#allocation9 + $0x18] sm:$0xf]
        %v784 = vld [vmem:[#allocation9 + $0x1c] sm:$0xf]
        %v785 = vld [vmem:[#allocation9 + $0x20] sm:$0xf]
        %v786 = vld [vmem:[#allocation9 + $0x24] sm:$0xf]
        %v787 = vld [vmem:[#allocation9 + $0x28] sm:$0xf]
        %v788 = vld [vmem:[#allocation9 + $0x2c] sm:$0xf]
        %v789 = vld [vmem:[#allocation9 + $0x30] sm:$0xf]
        %v790 = vld [vmem:[#allocation9 + $0x34] sm:$0xf]
        %v791 = vld [vmem:[#allocation9 + $0x38] sm:$0xf]
        %v792 = vld [vmem:[#allocation9 + $0x3c] sm:$0xf]
        %v793 = vld [vmem:[#allocation9 + $0x40] sm:$0xf]
        %v794 = vld [vmem:[#allocation9 + $0x44] sm:$0xf]
        %v795 = vld [vmem:[#allocation9 + $0x48] sm:$0xf]
        %v796 = vld [vmem:[#allocation9 + $0x4c] sm:$0xf]
        %v797 = vld [vmem:[#allocation9 + $0x50] sm:$0xf]
        %v798 = vld [vmem:[#allocation9 + $0x54] sm:$0xf]
        %v799 = vld [vmem:[#allocation9 + $0x58] sm:$0xf]
        %v800 = vld [vmem:[#allocation9 + $0x5c] sm:$0xf]
        %v801 = vld [vmem:[#allocation9 + $0x60] sm:$0xf]
        %v802 = vld [vmem:[#allocation9 + $0x64] sm:$0xf]
        %v803 = vld [vmem:[#allocation9 + $0x68] sm:$0xf]
        %v804 = vld [vmem:[#allocation9 + $0x6c] sm:$0xf]
        %v805 = vld [vmem:[#allocation9 + $0x70] sm:$0xf]
        %v806 = vld [vmem:[#allocation9 + $0x74] sm:$0xf]
        %v807 = vld [vmem:[#allocation9 + $0x78] sm:$0xf]
        %v808 = vld [vmem:[#allocation9 + $0x7c] sm:$0xf]
        %v809 = vld [vmem:[%s6] sm:$0x1]
        %v811 = vlaneseq
        %v812 = vshrl.u32 %v811, 7
        %v813 = vsub.s32 0, %v812
        %v814 = vrot.slane %v809, %v813
        %v848 = vunpack.c.l.b16 %v777
        %v849 = vunpack.c.l.b16 %v778
        %v850 = vunpack.c.l.b16 %v779
        %v851 = vunpack.c.l.b16 %v780
        %v852 = vunpack.c.l.b16 %v781
        %v853 = vunpack.c.l.b16 %v782
        %v854 = vunpack.c.l.b16 %v783
        %v855 = vunpack.c.l.b16 %v784
        %v856 = vunpack.c.l.b16 %v785
        %v857 = vunpack.c.l.b16 %v786
        %v858 = vunpack.c.l.b16 %v787
        %v859 = vunpack.c.l.b16 %v788
        %v860 = vunpack.c.l.b16 %v789
        %v861 = vunpack.c.l.b16 %v790
        %v862 = vunpack.c.l.b16 %v791
        %v863 = vunpack.c.l.b16 %v792
        %v864 = vunpack.c.l.b16 %v793
        %v865 = vunpack.c.l.b16 %v794
        %v866 = vunpack.c.l.b16 %v795
        %v867 = vunpack.c.l.b16 %v796
        %v868 = vunpack.c.l.b16 %v797
        %v869 = vunpack.c.l.b16 %v798
        %v870 = vunpack.c.l.b16 %v799
        %v871 = vunpack.c.l.b16 %v800
        %v872 = vunpack.c.l.b16 %v801
        %v873 = vunpack.c.l.b16 %v802
        %v874 = vunpack.c.l.b16 %v803
        %v875 = vunpack.c.l.b16 %v804
        %v876 = vunpack.c.l.b16 %v805
        %v877 = vunpack.c.l.b16 %v806
        %v878 = vunpack.c.l.b16 %v807
        %v879 = vunpack.c.l.b16 %v808
        %v880 = vpack.c.b16 %v849, %v848
        %v881 = vpack.c.b16 %v851, %v850
        %v882 = vpack.c.b16 %v853, %v852
        %v883 = vpack.c.b16 %v855, %v854
        %v884 = vpack.c.b16 %v857, %v856
        %v885 = vpack.c.b16 %v859, %v858
        %v886 = vpack.c.b16 %v861, %v860
        %v887 = vpack.c.b16 %v863, %v862
        %v888 = vpack.c.b16 %v865, %v864
        %v889 = vpack.c.b16 %v867, %v866
        %v890 = vpack.c.b16 %v869, %v868
        %v891 = vpack.c.b16 %v871, %v870
        %v892 = vpack.c.b16 %v873, %v872
        %v893 = vpack.c.b16 %v875, %v874
        %v894 = vpack.c.b16 %v877, %v876
        %v895 = vpack.c.b16 %v879, %v878
        %912 = vmatprep.subr.bf16.mxu0 0
        %913 = vmatpush1.bf16.msra.mxu0 %v887
        %914 = vmatprep.subr.bf16.mxu0 0
        %915 = vmatpush1.bf16.msra.mxu0 %v886
        %916 = vmatprep.subr.bf16.mxu0 0
        %917 = vmatpush1.bf16.msra.mxu0 %v885
        %918 = vmatprep.subr.bf16.mxu0 0
        %919 = vmatpush1.bf16.msra.mxu0 %v884
        %920 = vmatprep.subr.bf16.mxu0 0
        %921 = vmatpush1.bf16.msra.mxu0 %v883
        %922 = vmatprep.subr.bf16.mxu0 0
        %923 = vmatpush1.bf16.msra.mxu0 %v882
        %924 = vmatprep.subr.bf16.mxu0 0
        %925 = vmatpush1.bf16.msra.mxu0 %v881
        %926 = vmatprep.subr.bf16.mxu0 0
        %927 = vmatpush1.bf16.msra.mxu0 %v880
        %928 = vmatprep.subr.bf16.mxu0 0
        %929 = vmatpush2.bf16.msra.mxu0 %v895
        %930 = vmatprep.subr.bf16.mxu0 0
        %931 = vmatpush2.bf16.msra.mxu0 %v894
        %932 = vmatprep.subr.bf16.mxu0 0
        %933 = vmatpush2.bf16.msra.mxu0 %v893
        %934 = vmatprep.subr.bf16.mxu0 0
        %935 = vmatpush2.bf16.msra.mxu0 %v892
        %936 = vmatprep.subr.bf16.mxu0 0
        %937 = vmatpush2.bf16.msra.mxu0 %v891
        %938 = vmatprep.subr.bf16.mxu0 0
        %939 = vmatpush2.bf16.msra.mxu0 %v890
        %940 = vmatprep.subr.bf16.mxu0 0
        %941 = vmatpush2.bf16.msra.mxu0 %v889
        %942 = vmatprep.subr.bf16.mxu0 0
        %943 = vmatpush2.bf16.msra.mxu0 %v888
        %944 = vmatprep.mubr.bf16.mxu0 %v776
        %945 = vmatmul.mubr.bf16.gmra.mxu0 %v775
        %v946 = vpop.f32.mrf.mxu0
        %v947 = vadd.f32 %v814, %v946
        %v948 = vpop.f32.mrf.mxu0
        %v949 = vpop.f32.mrf.mxu0
        %v950 = vadd.f32 %v814, %v949
        %v951 = vpop.f32.mrf.mxu0
        %952 = vdwg.mxu0
        %vm953 = vcmask 64512
        %954 = vst.msk [vmem:[%s340] sm:$0xff] %vm953, %v947
        %955 = vst.msk [vmem:[%s340 + $0x8] sm:$0xff] %vm953, %v950
        %s956 = sand.u32 %s186, 1
        %s957 = scalar_lea.sflag [#allocation5], %s956
        %s958 = sand.u32 %s186, 1
        %s959 = smul.addr %s958, 16
        %s960 = scalar_lea.vmem [#allocation11], %s959
        // Predicated region
        $region65: #{dqn_forward.1} parent=47 // pred_check
          %p961 = pneg %p196
        $region66: #{dqn_forward.1} parent=47 // pred_check_branch
          %963 = sbr.rel (%p961) target = $region68
        $region67: #{dqn_forward.1} parent=47 // pred_region
          %s964 = smul.u32 2, %s26
          %s966 = ssub.s32 256, 256
          %967 = vsyncadd %s957, %s966
          %s968 = smul.addr %s964, 128
          %s969 = scalar_lea.hbm %s7, %s968
          %s970 = sshll.u32 %s960, 4
          %s971 = int_to_ptr.vmem [resolvable:$true] %s970
          %976 = dma.vmem_to_hbm [thread:$0]  %s971, 256, %s969, %s957, 128, 128, 8
        $region68: #{dqn_forward.1} parent=47 // pred_fallthru
          _
      $region48: #{dqn_forward.1} parent=5 // pred_fallthru
        _
      %p977 = scmp.le.s32.totalorder 2, %s21
      // Predicated region
      $region69: #{dqn_forward.1} parent=5 // pred_check
        %p978 = pneg %p977
      $region70: #{dqn_forward.1} parent=5 // pred_check_branch
        %980 = sbr.rel (%p978) target = $region72
      $region71: #{dqn_forward.1} parent=5 // pred_region
        %s981 = ssub.s32 %s21, 2
        // Predicated region
        $region73: #{dqn_forward.1} parent=71 // pred_check
          %p982 = pneg %p202
        $region74: #{dqn_forward.1} parent=71 // pred_check_branch
          %984 = sbr.rel (%p982) target = $region76
        $region75: #{dqn_forward.1} parent=71 // pred_region
          %s985 = sand.u32 %s187, 1
          %s986 = scalar_lea.sflag [#allocation5], %s985
          %s987 = sand.u32 %s187, 1
          %s988 = smul.addr %s987, 16
          %s989 = scalar_lea.vmem [#allocation11], %s988
          %990 = dma.done %s986, 256
        $region76: #{dqn_forward.1} parent=71 // pred_fallthru
          _
      $region72: #{dqn_forward.1} parent=5 // pred_fallthru
        _
    $region6: #{dqn_forward.1} parent=1 // loop_footer
      %s25 = sadd.s32 1, %s21
    $region7: #{dqn_forward.1} parent=1 // loop_footer_branch
      %20 = sbr.rel target = $region3
    $region8: #{dqn_forward.1} parent=1 // loop_exit
      _
    %991 = vsyncpa [#allocation4], 1
    %s992 = scalar_lea.sflag [#allocation4], 1
    %993 = vsyncpa %s992, 1
    %994 = vsyncpa [#allocation7], 1
    %995 = vsyncpa [#allocation10], 1
    %996 = vsyncpa [#allocation5], 1
    %s997 = scalar_lea.sflag [#allocation5], 1
    %998 = vsyncpa %s997, 1

</llo_original>
